<compile_context>
chip_gen: v5e
topology: v5e:2x2
jax: 0.10.0
libtpu: 0.0.40
codegen_flags: <defaults>
</compile_context>

<pallas_src>
import math

import jax
import jax.numpy as jnp
from jax.experimental import pallas as pl
from jax.experimental.pallas import tpu as pltpu


# ----------------------------------------------------------------------------
# Row-tile selection: largest divisor TR of Hout whose (TR*Wout, Cout) output
# tile is sublane-aligned (TR*Wout % 8 == 0) or covers the whole image.
# ----------------------------------------------------------------------------
def _pick_row_tile(hout, wout, max_m=1024):
    best = None
    for tr in range(1, hout + 1):
        if hout % tr:
            continue
        if tr * wout > max_m:
            continue
        if tr == hout or (tr * wout) % 8 == 0:
            best = tr
    return best if best is not None else hout


# ----------------------------------------------------------------------------
# Pallas kernel: TR output rows of a 3x3 conv (pad=1, stride s) + bias + ReLU.
# x_ref holds the phase-decomposed padded image:
#   x_ph[ph, pw, i, j, ci] = x_padded[s*i + ph, s*j + pw, ci]   (s == 1 is trivial)
# ----------------------------------------------------------------------------
def _make_block_kernel(stride, tr, wout):
    s = stride

    def kernel(x_ref, w_ref, b_ref, o_ref):
        # First output row of this tile.
        r0 = pl.multiple_of(pl.program_id(1) * tr, tr)
        # im2col: gather the 9 taps for TR output rows x Wout output columns,
        # concatenated along the channel (lane) axis -> (TR, Wout, 9*Cin).
        patches = []
        for kh in range(3):
            for kw in range(3):
                ph, pw = kh % s, kw % s          # phase within the stride
                oh, ow = kh // s, kw // s        # offset inside the phase image
                patches.append(
                    x_ref[0, ph, pw, pl.ds(r0 + oh, tr), ow:ow + wout, :])
        lhs = jnp.concatenate(patches, axis=-1)
        lhs = lhs.reshape(tr * wout, lhs.shape[-1])
        # Single MXU matmul: (TR*Wout, 9*Cin) @ (9*Cin, Cout), f32 accumulate.
        acc = jnp.dot(lhs, w_ref[...], preferred_element_type=jnp.float32)
        acc = acc + b_ref[...]                   # (1, Cout) broadcast bias
        o_ref[0] = jnp.maximum(acc, 0.0).astype(o_ref.dtype)

    return kernel


# ----------------------------------------------------------------------------
# One RepVGGBlockInfer: conv3x3(pad=1, stride) + bias + ReLU, NHWC.
# ----------------------------------------------------------------------------
def repvgg_block_infer(x_nhwc, w_flat, b, stride):
    """x_nhwc: (N, H, W, Cin) f32; w_flat: (9*Cin, Cout) rows ordered (kh, kw, ci);
    b: (1, Cout)."""
    n, h, w, cin = x_nhwc.shape
    cout = w_flat.shape[-1]
    s = stride
    hout = (h - 1) // s + 1
    wout = (w - 1) // s + 1

    # spatial pad=1
    xp = jnp.pad(x_nhwc, ((0, 0), (1, 1), (1, 1), (0, 0)))
    hp, wp = h + 2, w + 2
    if s == 1:
        # No phase split needed: pure reshape (no data movement in XLA).
        hq, wq = hp, wp
        x_ph = xp.reshape(n, 1, 1, hq, wq, cin)
    else:
        # Phase decomposition only for the (few) downsample blocks.
        eh, ew = (-hp) % s, (-wp) % s
        if eh or ew:
            xp = jnp.pad(xp, ((0, 0), (0, eh), (0, ew), (0, 0)))
        hq, wq = (hp + eh) // s, (wp + ew) // s
        x_ph = xp.reshape(n, hq, s, wq, s, cin).transpose(0, 2, 4, 1, 3, 5)

    tr = _pick_row_tile(hout, wout)
    kernel = _make_block_kernel(s, tr, wout)

    flops = 2 * n * hout * wout * 9 * cin * cout
    bytes_accessed = 4 * (n * s * s * hq * wq * cin
                          + 9 * cin * cout + cout
                          + n * hout * wout * cout)

    out = pl.pallas_call(
        kernel,
        out_shape=jax.ShapeDtypeStruct((n, hout * wout, cout), jnp.float32),
        grid=(n, hout // tr),
        in_specs=[
            # whole phase image of one batch element (resident across row tiles)
            pl.BlockSpec((1, s, s, hq, wq, cin),
                         lambda ni, hi: (ni, 0, 0, 0, 0, 0)),
            # full flattened weight and bias, grid-resident
            pl.BlockSpec((9 * cin, cout), lambda ni, hi: (0, 0)),
            pl.BlockSpec((1, cout), lambda ni, hi: (0, 0)),
        ],
        out_specs=pl.BlockSpec((1, tr * wout, cout),
                               lambda ni, hi: (ni, hi, 0)),
        compiler_params=pltpu.CompilerParams(
            dimension_semantics=("parallel", "parallel"),
            vmem_limit_bytes=64 * 1024 * 1024),
        cost_estimate=pl.CostEstimate(
            flops=flops, transcendentals=0, bytes_accessed=bytes_accessed),
    )(x_ph, w_flat, b)
    return out.reshape(n, hout, wout, cout)


# ----------------------------------------------------------------------------
# Full model: RepVGGBaseMInfer forward
# ----------------------------------------------------------------------------
def build_params(block_num, channel_num, key):
    """Deterministic synthetic parameters.  Each RepVGGBlockInfer has a fused
    3x3 conv: weight (out_c, in_c, 3, 3) and bias (out_c,), stride 2 on the
    first (downsample) block of each stage, else stride 1."""
    assert len(channel_num) - len(block_num) == 1
    params = []
    for i in range(len(block_num)):
        in_c, out_c = channel_num[i], channel_num[i + 1]
        for j in range(block_num[i]):
            c1 = in_c if j == 0 else out_c
            stride = 2 if j == 0 else 1
            key, kw, kb = jax.random.split(key, 3)
            scale = 1.0 / (3.0 * math.sqrt(c1))
            wgt = jax.random.normal(kw, (out_c, c1, 3, 3), jnp.float32) * scale
            bias = jax.random.normal(kb, (out_c,), jnp.float32) * 0.1
            params.append({"w": wgt, "b": bias, "stride": stride})
    return params


def repvgg_base_m_infer_forward(x_nchw, params):
    """Matches RepVGGBaseMInfer.forward: sequential (conv3x3+bias+ReLU) blocks."""
    x = jnp.transpose(x_nchw, (0, 2, 3, 1)).astype(jnp.float32)   # NCHW -> NHWC
    for p in params:
        out_c, in_c = p["w"].shape[0], p["w"].shape[1]
        # (O, I, kh, kw) -> (kh, kw, I, O) -> (9*I, O): one flat contraction dim,
        # prepared once in the wrapper so the kernel does zero weight reshaping.
        w_flat = jnp.transpose(p["w"], (2, 3, 1, 0)).reshape(9 * in_c, out_c)
        b = p["b"].reshape(1, out_c)
        x = repvgg_block_infer(x, w_flat, b, p["stride"])
    return jnp.transpose(x, (0, 3, 1, 2))                         # NHWC -> NCHW


def reference_forward(x_nchw, params):
    """Pure-JAX (XLA) reference for correctness checking."""
    out = x_nchw.astype(jnp.float32)
    for p in params:
        s = p["stride"]
        out = jax.lax.conv_general_dilated(
            out, p["w"], window_strides=(s, s), padding=((1, 1), (1, 1)),
            dimension_numbers=("NCHW", "OIHW", "NCHW"))
        out = out + p["b"].reshape(1, -1, 1, 1)
        out = jnp.maximum(out, 0.0)
    return out


if __name__ == "__main__":
    # Small config consistent with the module: 2 stages of 2 blocks each,
    # channels [4, 8, 16].  First block of each stage downsamples (stride 2).
    block_num = [2, 2]
    channel_num = [4, 8, 16]

    key = jax.random.PRNGKey(0)
    kx, kp = jax.random.split(key)
    x = jax.random.normal(kx, (2, 4, 16, 16), jnp.float32)  # NCHW input

    params = build_params(block_num, channel_num, kp)

    out = repvgg_base_m_infer_forward(x, params)
    out = jax.block_until_ready(out)

    ref = reference_forward(x, params)
    assert out.shape == ref.shape == (2, 16, 4, 4), (out.shape, ref.shape)
    max_err = float(jnp.max(jnp.abs(out - ref)))
    if max_err > 1e-4:
        raise AssertionError(f"Pallas kernel mismatch vs reference: {max_err}")

    print("KERNEL_OK")
</pallas_src>

<mosaic_0001>
module attributes {stable_mosaic.version = 11 : i64} {
  func.func @kernel(%arg0: i32, %arg1: i32, %arg2: memref<1x2x2x9x9x4xf32, #tpu.memory_space<vmem>>, %arg3: memref<36x8xf32, #tpu.memory_space<vmem>>, %arg4: memref<1x8xf32, #tpu.memory_space<vmem>>, %arg5: memref<1x64x8xf32, #tpu.memory_space<vmem>>) attributes {dimension_semantics = [#tpu.dimension_semantics<parallel>, #tpu.dimension_semantics<parallel>], iteration_bounds = array<i64: 2, 1>, scalar_prefetch = 0 : i64, scratch_operands = 0 : i64, tpu.core_type = #tpu.core_type<tc>, window_params = [{transform_indices = @transform_0, window_bounds = array<i64: 1, 2, 2, 9, 9, 4>}, {pipeline_mode = #tpu.pipeline_mode<synchronous>, transform_indices = @transform_1, window_bounds = array<i64: 36, 8>}, {pipeline_mode = #tpu.pipeline_mode<synchronous>, transform_indices = @transform_2, window_bounds = array<i64: 1, 8>}, {transform_indices = @transform_3, window_bounds = array<i64: 1, 64, 8>}]} {
    %c8_i32 = arith.constant 8 : i32
    %0 = arith.muli %arg1, %c8_i32 : i32
    %1 = tpu.assume_multiple %0, 8 : i32
    %c0_i32 = arith.constant 0 : i32
    %2 = arith.addi %1, %c0_i32 : i32
    %c0 = arith.constant 0 : index
    %c0_0 = arith.constant 0 : index
    %c0_1 = arith.constant 0 : index
    %3 = arith.index_cast %2 : i32 to index
    %c0_2 = arith.constant 0 : index
    %c0_3 = arith.constant 0 : index
    %4 = vector.load %arg2[%c0, %c0_0, %c0_1, %3, %c0_2, %c0_3] : memref<1x2x2x9x9x4xf32, #tpu.memory_space<vmem>>, vector<1x1x1x8x8x4xf32>
    %5 = vector.shape_cast %4 : vector<1x1x1x8x8x4xf32> to vector<8x8x4xf32>
    %c0_i32_4 = arith.constant 0 : i32
    %6 = arith.addi %1, %c0_i32_4 : i32
    %c0_5 = arith.constant 0 : index
    %c0_6 = arith.constant 0 : index
    %c1 = arith.constant 1 : index
    %7 = arith.index_cast %6 : i32 to index
    %c0_7 = arith.constant 0 : index
    %c0_8 = arith.constant 0 : index
    %8 = vector.load %arg2[%c0_5, %c0_6, %c1, %7, %c0_7, %c0_8] : memref<1x2x2x9x9x4xf32, #tpu.memory_space<vmem>>, vector<1x1x1x8x8x4xf32>
    %9 = vector.shape_cast %8 : vector<1x1x1x8x8x4xf32> to vector<8x8x4xf32>
    %c0_i32_9 = arith.constant 0 : i32
    %10 = arith.addi %1, %c0_i32_9 : i32
    %c0_10 = arith.constant 0 : index
    %c0_11 = arith.constant 0 : index
    %c0_12 = arith.constant 0 : index
    %11 = arith.index_cast %10 : i32 to index
    %c1_13 = arith.constant 1 : index
    %c0_14 = arith.constant 0 : index
    %12 = vector.load %arg2[%c0_10, %c0_11, %c0_12, %11, %c1_13, %c0_14] : memref<1x2x2x9x9x4xf32, #tpu.memory_space<vmem>>, vector<1x1x1x8x8x4xf32>
    %13 = vector.shape_cast %12 : vector<1x1x1x8x8x4xf32> to vector<8x8x4xf32>
    %c0_i32_15 = arith.constant 0 : i32
    %14 = arith.addi %1, %c0_i32_15 : i32
    %c0_16 = arith.constant 0 : index
    %c1_17 = arith.constant 1 : index
    %c0_18 = arith.constant 0 : index
    %15 = arith.index_cast %14 : i32 to index
    %c0_19 = arith.constant 0 : index
    %c0_20 = arith.constant 0 : index
    %16 = vector.load %arg2[%c0_16, %c1_17, %c0_18, %15, %c0_19, %c0_20] : memref<1x2x2x9x9x4xf32, #tpu.memory_space<vmem>>, vector<1x1x1x8x8x4xf32>
    %17 = vector.shape_cast %16 : vector<1x1x1x8x8x4xf32> to vector<8x8x4xf32>
    %c0_i32_21 = arith.constant 0 : i32
    %18 = arith.addi %1, %c0_i32_21 : i32
    %c0_22 = arith.constant 0 : index
    %c1_23 = arith.constant 1 : index
    %c1_24 = arith.constant 1 : index
    %19 = arith.index_cast %18 : i32 to index
    %c0_25 = arith.constant 0 : index
    %c0_26 = arith.constant 0 : index
    %20 = vector.load %arg2[%c0_22, %c1_23, %c1_24, %19, %c0_25, %c0_26] : memref<1x2x2x9x9x4xf32, #tpu.memory_space<vmem>>, vector<1x1x1x8x8x4xf32>
    %21 = vector.shape_cast %20 : vector<1x1x1x8x8x4xf32> to vector<8x8x4xf32>
    %c0_i32_27 = arith.constant 0 : i32
    %22 = arith.addi %1, %c0_i32_27 : i32
    %c0_28 = arith.constant 0 : index
    %c1_29 = arith.constant 1 : index
    %c0_30 = arith.constant 0 : index
    %23 = arith.index_cast %22 : i32 to index
    %c1_31 = arith.constant 1 : index
    %c0_32 = arith.constant 0 : index
    %24 = vector.load %arg2[%c0_28, %c1_29, %c0_30, %23, %c1_31, %c0_32] : memref<1x2x2x9x9x4xf32, #tpu.memory_space<vmem>>, vector<1x1x1x8x8x4xf32>
    %25 = vector.shape_cast %24 : vector<1x1x1x8x8x4xf32> to vector<8x8x4xf32>
    %c1_i32 = arith.constant 1 : i32
    %26 = arith.addi %1, %c1_i32 : i32
    %c0_33 = arith.constant 0 : index
    %c0_34 = arith.constant 0 : index
    %c0_35 = arith.constant 0 : index
    %27 = arith.index_cast %26 : i32 to index
    %c0_36 = arith.constant 0 : index
    %c0_37 = arith.constant 0 : index
    %28 = vector.load %arg2[%c0_33, %c0_34, %c0_35, %27, %c0_36, %c0_37] : memref<1x2x2x9x9x4xf32, #tpu.memory_space<vmem>>, vector<1x1x1x8x8x4xf32>
    %29 = vector.shape_cast %28 : vector<1x1x1x8x8x4xf32> to vector<8x8x4xf32>
    %c1_i32_38 = arith.constant 1 : i32
    %30 = arith.addi %1, %c1_i32_38 : i32
    %c0_39 = arith.constant 0 : index
    %c0_40 = arith.constant 0 : index
    %c1_41 = arith.constant 1 : index
    %31 = arith.index_cast %30 : i32 to index
    %c0_42 = arith.constant 0 : index
    %c0_43 = arith.constant 0 : index
    %32 = vector.load %arg2[%c0_39, %c0_40, %c1_41, %31, %c0_42, %c0_43] : memref<1x2x2x9x9x4xf32, #tpu.memory_space<vmem>>, vector<1x1x1x8x8x4xf32>
    %33 = vector.shape_cast %32 : vector<1x1x1x8x8x4xf32> to vector<8x8x4xf32>
    %c1_i32_44 = arith.constant 1 : i32
    %34 = arith.addi %1, %c1_i32_44 : i32
    %c0_45 = arith.constant 0 : index
    %c0_46 = arith.constant 0 : index
    %c0_47 = arith.constant 0 : index
    %35 = arith.index_cast %34 : i32 to index
    %c1_48 = arith.constant 1 : index
    %c0_49 = arith.constant 0 : index
    %36 = vector.load %arg2[%c0_45, %c0_46, %c0_47, %35, %c1_48, %c0_49] : memref<1x2x2x9x9x4xf32, #tpu.memory_space<vmem>>, vector<1x1x1x8x8x4xf32>
    %37 = vector.shape_cast %36 : vector<1x1x1x8x8x4xf32> to vector<8x8x4xf32>
    %38 = tpu.concatenate %5, %9, %13, %17, %21, %25, %29, %33, %37 in 2 : vector<8x8x4xf32>, vector<8x8x4xf32>, vector<8x8x4xf32>, vector<8x8x4xf32>, vector<8x8x4xf32>, vector<8x8x4xf32>, vector<8x8x4xf32>, vector<8x8x4xf32>, vector<8x8x4xf32> -> vector<8x8x36xf32>
    %39 = vector.shape_cast %38 : vector<8x8x36xf32> to vector<64x36xf32>
    %c0_50 = arith.constant 0 : index
    %c0_51 = arith.constant 0 : index
    %40 = vector.load %arg3[%c0_50, %c0_51] : memref<36x8xf32, #tpu.memory_space<vmem>>, vector<36x8xf32>
    %cst = arith.constant dense<0.000000e+00> : vector<64x8xf32>
    %41 = tpu.matmul %39, %40, %cst {dimension_numbers = #tpu.dot_dimension_numbers<[1], [0], [0], [1], [0, 0, 1, 1], [], []>} : vector<64x36xf32>, vector<36x8xf32>, vector<64x8xf32> -> vector<64x8xf32>
    %c0_52 = arith.constant 0 : index
    %c0_53 = arith.constant 0 : index
    %42 = vector.load %arg4[%c0_52, %c0_53] : memref<1x8xf32, #tpu.memory_space<vmem>>, vector<1x8xf32>
    %43 = vector.broadcast %42 : vector<1x8xf32> to vector<64x8xf32>
    %44 = arith.addf %41, %43 : vector<64x8xf32>
    %cst_54 = arith.constant 0.000000e+00 : f32
    %45 = vector.broadcast %cst_54 : f32 to vector<64x8xf32>
    %46 = arith.maximumf %44, %45 : vector<64x8xf32>
    %c0_55 = arith.constant 0 : index
    %c0_56 = arith.constant 0 : index
    %c0_57 = arith.constant 0 : index
    %47 = vector.load %arg5[%c0_55, %c0_56, %c0_57] : memref<1x64x8xf32, #tpu.memory_space<vmem>>, vector<1x64x8xf32>
    %48 = vector.shape_cast %47 : vector<1x64x8xf32> to vector<64x8xf32>
    %49 = vector.shape_cast %46 : vector<64x8xf32> to vector<1x64x8xf32>
    tpu.vector_store %arg5[%c0_55, %c0_56, %c0_57], %49 {strides = array<i32>} : memref<1x64x8xf32, #tpu.memory_space<vmem>>, vector<1x64x8xf32>,
    return
  }
  func.func @transform_0(%arg0: i32, %arg1: i32) -> (i32, i32, i32, i32, i32, i32) {
    %c0_i32 = arith.constant 0 : i32
    %c0_i32_0 = arith.constant 0 : i32
    %c0_i32_1 = arith.constant 0 : i32
    %c0_i32_2 = arith.constant 0 : i32
    %c0_i32_3 = arith.constant 0 : i32
    %c0_i32_4 = arith.constant 0 : i32
    return %arg0, %c0_i32, %c0_i32_0, %c0_i32_1, %c0_i32_2, %c0_i32_3 : i32, i32, i32, i32, i32, i32
  }
  func.func @transform_1(%arg0: i32, %arg1: i32) -> (i32, i32) {
    %c0_i32 = arith.constant 0 : i32
    %c0_i32_0 = arith.constant 0 : i32
    %c0_i32_1 = arith.constant 0 : i32
    return %c0_i32, %c0_i32_0 : i32, i32
  }
  func.func @transform_2(%arg0: i32, %arg1: i32) -> (i32, i32) {
    %c0_i32 = arith.constant 0 : i32
    %c0_i32_0 = arith.constant 0 : i32
    %c0_i32_1 = arith.constant 0 : i32
    return %c0_i32, %c0_i32_0 : i32, i32
  }
  func.func @transform_3(%arg0: i32, %arg1: i32) -> (i32, i32, i32) {
    %c0_i32 = arith.constant 0 : i32
    %c0_i32_0 = arith.constant 0 : i32
    return %arg0, %arg1, %c0_i32 : i32, i32, i32
  }
}

</mosaic_0001>

<llo_original>
// kernel: tpu_custom_call.1
$region0: #{tpu_custom_call.1}
  #allocation0 [shape = 'u32[]', space=smem, size = 0x4, offset = 0x4, fixed_abs, tag = 'smem constant byte address 0x4 - core index']
  #allocation1 [shape = 'u32[72,128]{1,0:T(1,128)}', space=vmem, size = 0x9000, scoped, tag = 'internal scratch']
  %s0 = inlined_call_operand.vmem [shape: f32[2,2,2,9,9,4], index: 0, kind: input, shape index: {}]
  %s1 = inlined_call_operand.vmem [shape: f32[36,8], index: 1, kind: input, shape index: {}]
  %s2 = inlined_call_operand.vmem [shape: f32[1,8], index: 2, kind: input, shape index: {}]
  %s3 = inlined_call_operand.vmem [shape: f32[2,64,8], index: 3, kind: output, shape index: {}]
  %s4 = sld [smem:[#allocation0]]
  $region45: #{tpu_custom_call.1} parent=0
    _
  %s6 = ssub.s32 1, %s4
  %s7 = scalar_select 0, %s6, %s4
  loop: start=0, step=1, limit=4
  $region2: #{tpu_custom_call.1} parent=0 // loop_pre_header
    _
  $region3: #{tpu_custom_call.1} parent=0 // loop_header
    %s9 = sphi 0, %s13
    %p10 = scmp.ge.s32.totalorder %s9, 4
    %s16 = sphi 0, %s28
    %s17 = sphi 0, %s24
    %s18 = sphi 0, %s16
    %s19 = sphi 0, %s17
    %s20 = sphi 0, %s18
    %s21 = sphi 0, %s19
    %s31 = sphi 0, %s33
    %s34 = sphi 0, %s31
    %s35 = sphi 0, %s34
    %s51 = sphi 0, %s35
    %s55 = sphi 0, %s55
    %s57 = sphi 0, %s55
    %s58 = sphi 0, %s57
    %s72 = sphi 0, %s58
    %s76 = sphi 0, %s76
    %s78 = sphi 0, %s76
    %s79 = sphi 0, %s78
    %s93 = sphi 0, %s79
    %s101 = sphi 0, %s103
    %s104 = sphi 0, %s101
    %s105 = sphi 0, %s104
    %s121 = sphi 0, %s105
  $region4: #{tpu_custom_call.1} parent=0 // loop_header_branch
    %12 = sbr.rel (%p10) target = $region8
  $region5: #{tpu_custom_call.1} parent=0 // loop_body
    %s14 = ssub.s32 %s9, 1
    %s15 = ssub.s32 %s9, 2
    %s22 = sadd.s32 1, %s17
    %p23 = scmp.ge.s32.totalorder %s22, 1
    %s24 = scalar_select %p23, 0, %s22
    %s25 = sadd.s32 1, %s16
    %s26 = scalar_select %p23, %s25, %s16
    %p27 = scmp.ge.s32.totalorder %s26, 2
    %s28 = scalar_select %p27, 0, %s26
    %s29 = ssub.s32 %s16, %s28
    %p30 = scmp.eq.s32.totalorder %s29, 0
    %s32 = sadd.s32 %s31, 1
    %s33 = scalar_select %p30, %s31, %s32
    %p36 = pneg %p30
    %p37 = scmp.eq.s32.totalorder %s9, 1
    %p38 = por %p36, %p37
    %p39 = scmp.ne.s32.totalorder %s31, %s34
    %p40 = scmp.eq.s32.totalorder %s9, 0
    %p41 = por %p39, %p40
    %p42 = scmp.ne.s32.totalorder %s31, %s34
    %p43 = scmp.eq.s32.totalorder %s14, 1
    %p44 = por %p42, %p43
    %p45 = scmp.ne.s32.totalorder %s34, %s35
    %p46 = scmp.eq.s32.totalorder %s14, 0
    %p47 = por %p45, %p46
    %p48 = scmp.ne.s32.totalorder %s34, %s35
    %p49 = scmp.eq.s32.totalorder %s15, 1
    %p50 = por %p48, %p49
    %p52 = scmp.ne.s32.totalorder %s35, %s51
    %p53 = scmp.eq.s32.totalorder %s15, 0
    %p54 = por %p52, %p53
    %s56 = sadd.s32 %s55, 1
    %p59 = scmp.eq.s32.totalorder %s9, 1
    %p60 = scmp.ne.s32.totalorder %s55, %s57
    %p61 = scmp.eq.s32.totalorder %s9, 0
    %p62 = por %p60, %p61
    %p63 = scmp.ne.s32.totalorder %s55, %s57
    %p64 = scmp.eq.s32.totalorder %s14, 1
    %p65 = por %p63, %p64
    %p66 = scmp.ne.s32.totalorder %s57, %s58
    %p67 = scmp.eq.s32.totalorder %s14, 0
    %p68 = por %p66, %p67
    %p69 = scmp.ne.s32.totalorder %s57, %s58
    %p70 = scmp.eq.s32.totalorder %s15, 1
    %p71 = por %p69, %p70
    %p73 = scmp.ne.s32.totalorder %s58, %s72
    %p74 = scmp.eq.s32.totalorder %s15, 0
    %p75 = por %p73, %p74
    %s77 = sadd.s32 %s76, 1
    %p80 = scmp.eq.s32.totalorder %s9, 1
    %p81 = scmp.ne.s32.totalorder %s76, %s78
    %p82 = scmp.eq.s32.totalorder %s9, 0
    %p83 = por %p81, %p82
    %p84 = scmp.ne.s32.totalorder %s76, %s78
    %p85 = scmp.eq.s32.totalorder %s14, 1
    %p86 = por %p84, %p85
    %p87 = scmp.ne.s32.totalorder %s78, %s79
    %p88 = scmp.eq.s32.totalorder %s14, 0
    %p89 = por %p87, %p88
    %p90 = scmp.ne.s32.totalorder %s78, %s79
    %p91 = scmp.eq.s32.totalorder %s15, 1
    %p92 = por %p90, %p91
    %p94 = scmp.ne.s32.totalorder %s79, %s93
    %p95 = scmp.eq.s32.totalorder %s15, 0
    %p96 = por %p94, %p95
    %s97 = ssub.s32 %s16, %s28
    %s98 = ssub.s32 %s17, %s24
    %s99 = sor.u32 %s97, %s98
    %p100 = scmp.eq.s32.totalorder %s99, 0
    %s102 = sadd.s32 %s101, 1
    %s103 = scalar_select %p100, %s101, %s102
    %p106 = pneg %p100
    %p107 = scmp.eq.s32.totalorder %s9, 1
    %p108 = por %p106, %p107
    %p109 = scmp.ne.s32.totalorder %s101, %s104
    %p110 = scmp.eq.s32.totalorder %s9, 0
    %p111 = por %p109, %p110
    %p112 = scmp.ne.s32.totalorder %s101, %s104
    %p113 = scmp.eq.s32.totalorder %s14, 1
    %p114 = por %p112, %p113
    %p115 = scmp.ne.s32.totalorder %s104, %s105
    %p116 = scmp.eq.s32.totalorder %s14, 0
    %p117 = por %p115, %p116
    %p118 = scmp.ne.s32.totalorder %s104, %s105
    %p119 = scmp.eq.s32.totalorder %s15, 1
    %p120 = por %p118, %p119
    %p122 = scmp.ne.s32.totalorder %s105, %s121
    %p123 = scmp.eq.s32.totalorder %s15, 0
    %p124 = por %p122, %p123
    %p125 = scmp.le.s32.totalorder 1, %s9
    %p126 = scmp.lt.s32.totalorder %s9, 3
    %p127 = pnand %p125, %p126
    %p128 = pneg %p127
    // Predicated region
    $region9: #{tpu_custom_call.1} parent=5 // pred_check
      _
    $region10: #{tpu_custom_call.1} parent=5 // pred_check_branch
      %130 = sbr.rel (%p127) target = $region12
    $region11: #{tpu_custom_call.1} parent=5 // pred_region
      %s131 = ssub.s32 %s9, 1
      // Predicated region
      $region13: #{tpu_custom_call.1} parent=11 // pred_check
        %p132 = pneg %p68
      $region14: #{tpu_custom_call.1} parent=11 // pred_check_branch
        %134 = sbr.rel (%p132) target = $region16
      $region15: #{tpu_custom_call.1} parent=11 // pred_region
        _
      $region16: #{tpu_custom_call.1} parent=11 // pred_fallthru
        _
      // Predicated region
      $region17: #{tpu_custom_call.1} parent=11 // pred_check
        %p135 = pneg %p89
      $region18: #{tpu_custom_call.1} parent=11 // pred_check_branch
        %137 = sbr.rel (%p135) target = $region20
      $region19: #{tpu_custom_call.1} parent=11 // pred_region
        _
      $region20: #{tpu_custom_call.1} parent=11 // pred_fallthru
        _
    $region12: #{tpu_custom_call.1} parent=5 // pred_fallthru
      _
    %p138 = scmp.lt.s32.totalorder %s9, 2
    // Predicated region
    $region21: #{tpu_custom_call.1} parent=5 // pred_check
      %p139 = pneg %p138
    $region22: #{tpu_custom_call.1} parent=5 // pred_check_branch
      %141 = sbr.rel (%p139) target = $region24
    $region23: #{tpu_custom_call.1} parent=5 // pred_region
      // Predicated region
      $region25: #{tpu_custom_call.1} parent=23 // pred_check
        %p142 = pneg %p41
      $region26: #{tpu_custom_call.1} parent=23 // pred_check_branch
        %144 = sbr.rel (%p142) target = $region28
      $region27: #{tpu_custom_call.1} parent=23 // pred_region
        %p145 = scmp.lt.s32.totalorder %s16, 1
        %s146 = scalar_select %p145, %s16, 1
        %s147 = smul.addr %s146, 72
        %s148 = smul.addr %s147, 8
        %s149 = scalar_lea.vmem %s0, %s148
      $region28: #{tpu_custom_call.1} parent=23 // pred_fallthru
        _
    $region24: #{tpu_custom_call.1} parent=5 // pred_fallthru
      _
    %p150 = scmp.le.s32.totalorder 1, %s9
    %p151 = scmp.lt.s32.totalorder %s9, 3
    %p152 = pnand %p150, %p151
    %p153 = pneg %p152
    // Predicated region
    $region29: #{tpu_custom_call.1} parent=5 // pred_check
      _
    $region30: #{tpu_custom_call.1} parent=5 // pred_check_branch
      %155 = sbr.rel (%p152) target = $region32
    $region31: #{tpu_custom_call.1} parent=5 // pred_region
      %s156 = ssub.s32 %s9, 1
      %p157 = scmp.lt.s32.totalorder %s18, 1
      %s158 = scalar_select %p157, %s18, 1
      %s159 = smul.addr %s158, 72
      %s160 = smul.addr %s159, 8
      %s161 = scalar_lea.vmem %s0, %s160
      %p162 = pneg %p47
      %p163 = pneg %p44
      %p164 = pneg %p68
      %p165 = pneg %p65
      %p166 = pneg %p89
      %p167 = pneg %p86
      %p168 = pneg %p117
      %p169 = pneg %p114
      %s170 = smul.u32 8, %s19
      %p171 = scmp.lt.s32.totalorder %s18, 1
      %s172 = scalar_select %p171, %s18, 1
      %p173 = scmp.lt.s32.totalorder %s170, 7
      %s174 = scalar_select %p173, %s170, 7
      %s175 = smul.addr %s172, 8
      %s176 = sadd.s32 %s174, %s175
      %s177 = smul.addr %s176, 8
      %s178 = scalar_lea.vmem %s3, %s177
      %p179 = scmp.lt.s32.totalorder %s18, 1
      %s180 = scalar_select %p179, %s18, 1
      %s181 = smul.addr %s180, 72
      %s182 = smul.addr %s181, 8
      %s183 = scalar_lea.vmem %s0, %s182
      %s184 = smul.u32 8, %s19
      %p185 = scmp.lt.s32.totalorder %s18, 1
      %s186 = scalar_select %p185, %s18, 1
      %p187 = scmp.lt.s32.totalorder %s184, 7
      %s188 = scalar_select %p187, %s184, 7
      %s189 = smul.addr %s186, 8
      %s190 = sadd.s32 %s188, %s189
      %s191 = smul.addr %s190, 8
      %s192 = scalar_lea.vmem %s3, %s191
      %s193 = smul.u32 8, %s19
      %s194 = smul.u32 %s19, 8
      %s195 = smul.u32 %s194, 16
      %s196 = scalar_lea.vmem %s183, %s195
      %v197 = vld [vmem:[%s196] sm:$0xff]
      %v198 = vld [vmem:[%s196 + $0x10] sm:$0xff]
      %v199 = vld [vmem:[%s196 + $0x20] sm:$0xff]
      %v200 = vld [vmem:[%s196 + $0x30] sm:$0xff]
      %v201 = vld [vmem:[%s196 + $0x40] sm:$0xff]
      %v202 = vld [vmem:[%s196 + $0x50] sm:$0xff]
      %v203 = vld [vmem:[%s196 + $0x60] sm:$0xff]
      %v204 = vld [vmem:[%s196 + $0x70] sm:$0xff]
      %s205 = sadd.s32 %s195, 144
      %s206 = scalar_lea.vmem %s183, %s205
      %v207 = vld [vmem:[%s206] sm:$0xff]
      %v208 = vld [vmem:[%s206 + $0x10] sm:$0xff]
      %v209 = vld [vmem:[%s206 + $0x20] sm:$0xff]
      %v210 = vld [vmem:[%s206 + $0x30] sm:$0xff]
      %v211 = vld [vmem:[%s206 + $0x40] sm:$0xff]
      %v212 = vld [vmem:[%s206 + $0x50] sm:$0xff]
      %v213 = vld [vmem:[%s206 + $0x60] sm:$0xff]
      %v214 = vld [vmem:[%s206 + $0x70] sm:$0xff]
      %v215 = vld [vmem:[%s196 + $0x1] sm:$0xff]
      %v216 = vld [vmem:[%s196 + $0x11] sm:$0xff]
      %v217 = vld [vmem:[%s196 + $0x21] sm:$0xff]
      %v218 = vld [vmem:[%s196 + $0x31] sm:$0xff]
      %v219 = vld [vmem:[%s196 + $0x41] sm:$0xff]
      %v220 = vld [vmem:[%s196 + $0x51] sm:$0xff]
      %v221 = vld [vmem:[%s196 + $0x61] sm:$0xff]
      %v222 = vld [vmem:[%s196 + $0x71] sm:$0xff]
      %s223 = sadd.s32 %s195, 288
      %s224 = scalar_lea.vmem %s183, %s223
      %v225 = vld [vmem:[%s224] sm:$0xff]
      %v226 = vld [vmem:[%s224 + $0x10] sm:$0xff]
      %v227 = vld [vmem:[%s224 + $0x20] sm:$0xff]
      %v228 = vld [vmem:[%s224 + $0x30] sm:$0xff]
      %v229 = vld [vmem:[%s224 + $0x40] sm:$0xff]
      %v230 = vld [vmem:[%s224 + $0x50] sm:$0xff]
      %v231 = vld [vmem:[%s224 + $0x60] sm:$0xff]
      %v232 = vld [vmem:[%s224 + $0x70] sm:$0xff]
      %s233 = sadd.s32 %s205, 288
      %s234 = scalar_lea.vmem %s183, %s233
      %v235 = vld [vmem:[%s234] sm:$0xff]
      %v236 = vld [vmem:[%s234 + $0x10] sm:$0xff]
      %v237 = vld [vmem:[%s234 + $0x20] sm:$0xff]
      %v238 = vld [vmem:[%s234 + $0x30] sm:$0xff]
      %v239 = vld [vmem:[%s234 + $0x40] sm:$0xff]
      %v240 = vld [vmem:[%s234 + $0x50] sm:$0xff]
      %v241 = vld [vmem:[%s234 + $0x60] sm:$0xff]
      %v242 = vld [vmem:[%s234 + $0x70] sm:$0xff]
      %v243 = vld [vmem:[%s224 + $0x1] sm:$0xff]
      %v244 = vld [vmem:[%s224 + $0x11] sm:$0xff]
      %v245 = vld [vmem:[%s224 + $0x21] sm:$0xff]
      %v246 = vld [vmem:[%s224 + $0x31] sm:$0xff]
      %v247 = vld [vmem:[%s224 + $0x41] sm:$0xff]
      %v248 = vld [vmem:[%s224 + $0x51] sm:$0xff]
      %v249 = vld [vmem:[%s224 + $0x61] sm:$0xff]
      %v250 = vld [vmem:[%s224 + $0x71] sm:$0xff]
      %s251 = sadd.s32 %s194, 1
      %s252 = smul.u32 %s251, 16
      %s253 = scalar_lea.vmem %s183, %s252
      %v254 = vld [vmem:[%s253] sm:$0xff]
      %v255 = vld [vmem:[%s253 + $0x10] sm:$0xff]
      %v256 = vld [vmem:[%s253 + $0x20] sm:$0xff]
      %v257 = vld [vmem:[%s253 + $0x30] sm:$0xff]
      %v258 = vld [vmem:[%s253 + $0x40] sm:$0xff]
      %v259 = vld [vmem:[%s253 + $0x50] sm:$0xff]
      %v260 = vld [vmem:[%s253 + $0x60] sm:$0xff]
      %v261 = vld [vmem:[%s253 + $0x70] sm:$0xff]
      %s262 = sadd.s32 %s252, 144
      %s263 = scalar_lea.vmem %s183, %s262
      %v264 = vld [vmem:[%s263] sm:$0xff]
      %v265 = vld [vmem:[%s263 + $0x10] sm:$0xff]
      %v266 = vld [vmem:[%s263 + $0x20] sm:$0xff]
      %v267 = vld [vmem:[%s263 + $0x30] sm:$0xff]
      %v268 = vld [vmem:[%s263 + $0x40] sm:$0xff]
      %v269 = vld [vmem:[%s263 + $0x50] sm:$0xff]
      %v270 = vld [vmem:[%s263 + $0x60] sm:$0xff]
      %v271 = vld [vmem:[%s263 + $0x70] sm:$0xff]
      %v272 = vld [vmem:[%s253 + $0x1] sm:$0xff]
      %v273 = vld [vmem:[%s253 + $0x11] sm:$0xff]
      %v274 = vld [vmem:[%s253 + $0x21] sm:$0xff]
      %v275 = vld [vmem:[%s253 + $0x31] sm:$0xff]
      %v276 = vld [vmem:[%s253 + $0x41] sm:$0xff]
      %v277 = vld [vmem:[%s253 + $0x51] sm:$0xff]
      %v278 = vld [vmem:[%s253 + $0x61] sm:$0xff]
      %v279 = vld [vmem:[%s253 + $0x71] sm:$0xff]
      %288 = vrot.lane.b32.xlu0 %v207, 4
      %v289 = vpop.permute.xlu0 %288
      %290 = vrot.lane.b32.xlu0 %v208, 4
      %v291 = vpop.permute.xlu0 %290
      %292 = vrot.lane.b32.xlu0 %v209, 4
      %v293 = vpop.permute.xlu0 %292
      %294 = vrot.lane.b32.xlu0 %v210, 4
      %v295 = vpop.permute.xlu0 %294
      %296 = vrot.lane.b32.xlu0 %v211, 4
      %v297 = vpop.permute.xlu0 %296
      %298 = vrot.lane.b32.xlu0 %v212, 4
      %v299 = vpop.permute.xlu0 %298
      %300 = vrot.lane.b32.xlu0 %v213, 4
      %v301 = vpop.permute.xlu0 %300
      %302 = vrot.lane.b32.xlu0 %v214, 4
      %v303 = vpop.permute.xlu0 %302
      %320 = vrot.lane.b32.xlu0 %v215, 8
      %v321 = vpop.permute.xlu0 %320
      %322 = vrot.lane.b32.xlu0 %v216, 8
      %v323 = vpop.permute.xlu0 %322
      %324 = vrot.lane.b32.xlu0 %v217, 8
      %v325 = vpop.permute.xlu0 %324
      %326 = vrot.lane.b32.xlu0 %v218, 8
      %v327 = vpop.permute.xlu0 %326
      %328 = vrot.lane.b32.xlu0 %v219, 8
      %v329 = vpop.permute.xlu0 %328
      %330 = vrot.lane.b32.xlu0 %v220, 8
      %v331 = vpop.permute.xlu0 %330
      %332 = vrot.lane.b32.xlu0 %v221, 8
      %v333 = vpop.permute.xlu0 %332
      %334 = vrot.lane.b32.xlu0 %v222, 8
      %v335 = vpop.permute.xlu0 %334
      %352 = vrot.lane.b32.xlu0 %v225, 12
      %v353 = vpop.permute.xlu0 %352
      %354 = vrot.lane.b32.xlu0 %v226, 12
      %v355 = vpop.permute.xlu0 %354
      %356 = vrot.lane.b32.xlu0 %v227, 12
      %v357 = vpop.permute.xlu0 %356
      %358 = vrot.lane.b32.xlu0 %v228, 12
      %v359 = vpop.permute.xlu0 %358
      %360 = vrot.lane.b32.xlu0 %v229, 12
      %v361 = vpop.permute.xlu0 %360
      %362 = vrot.lane.b32.xlu0 %v230, 12
      %v363 = vpop.permute.xlu0 %362
      %364 = vrot.lane.b32.xlu0 %v231, 12
      %v365 = vpop.permute.xlu0 %364
      %366 = vrot.lane.b32.xlu0 %v232, 12
      %v367 = vpop.permute.xlu0 %366
      %384 = vrot.lane.b32.xlu0 %v235, 16
      %v385 = vpop.permute.xlu0 %384
      %386 = vrot.lane.b32.xlu0 %v236, 16
      %v387 = vpop.permute.xlu0 %386
      %388 = vrot.lane.b32.xlu0 %v237, 16
      %v389 = vpop.permute.xlu0 %388
      %390 = vrot.lane.b32.xlu0 %v238, 16
      %v391 = vpop.permute.xlu0 %390
      %392 = vrot.lane.b32.xlu0 %v239, 16
      %v393 = vpop.permute.xlu0 %392
      %394 = vrot.lane.b32.xlu0 %v240, 16
      %v395 = vpop.permute.xlu0 %394
      %396 = vrot.lane.b32.xlu0 %v241, 16
      %v397 = vpop.permute.xlu0 %396
      %398 = vrot.lane.b32.xlu0 %v242, 16
      %v399 = vpop.permute.xlu0 %398
      %416 = vrot.lane.b32.xlu0 %v243, 20
      %v417 = vpop.permute.xlu0 %416
      %418 = vrot.lane.b32.xlu0 %v244, 20
      %v419 = vpop.permute.xlu0 %418
      %420 = vrot.lane.b32.xlu0 %v245, 20
      %v421 = vpop.permute.xlu0 %420
      %422 = vrot.lane.b32.xlu0 %v246, 20
      %v423 = vpop.permute.xlu0 %422
      %424 = vrot.lane.b32.xlu0 %v247, 20
      %v425 = vpop.permute.xlu0 %424
      %426 = vrot.lane.b32.xlu0 %v248, 20
      %v427 = vpop.permute.xlu0 %426
      %428 = vrot.lane.b32.xlu0 %v249, 20
      %v429 = vpop.permute.xlu0 %428
      %430 = vrot.lane.b32.xlu0 %v250, 20
      %v431 = vpop.permute.xlu0 %430
      %448 = vrot.lane.b32.xlu0 %v254, 24
      %v449 = vpop.permute.xlu0 %448
      %450 = vrot.lane.b32.xlu0 %v255, 24
      %v451 = vpop.permute.xlu0 %450
      %452 = vrot.lane.b32.xlu0 %v256, 24
      %v453 = vpop.permute.xlu0 %452
      %454 = vrot.lane.b32.xlu0 %v257, 24
      %v455 = vpop.permute.xlu0 %454
      %456 = vrot.lane.b32.xlu0 %v258, 24
      %v457 = vpop.permute.xlu0 %456
      %458 = vrot.lane.b32.xlu0 %v259, 24
      %v459 = vpop.permute.xlu0 %458
      %460 = vrot.lane.b32.xlu0 %v260, 24
      %v461 = vpop.permute.xlu0 %460
      %462 = vrot.lane.b32.xlu0 %v261, 24
      %v463 = vpop.permute.xlu0 %462
      %480 = vrot.lane.b32.xlu0 %v264, 28
      %v481 = vpop.permute.xlu0 %480
      %482 = vrot.lane.b32.xlu0 %v265, 28
      %v483 = vpop.permute.xlu0 %482
      %484 = vrot.lane.b32.xlu0 %v266, 28
      %v485 = vpop.permute.xlu0 %484
      %486 = vrot.lane.b32.xlu0 %v267, 28
      %v487 = vpop.permute.xlu0 %486
      %488 = vrot.lane.b32.xlu0 %v268, 28
      %v489 = vpop.permute.xlu0 %488
      %490 = vrot.lane.b32.xlu0 %v269, 28
      %v491 = vpop.permute.xlu0 %490
      %492 = vrot.lane.b32.xlu0 %v270, 28
      %v493 = vpop.permute.xlu0 %492
      %494 = vrot.lane.b32.xlu0 %v271, 28
      %v495 = vpop.permute.xlu0 %494
      %512 = vrot.lane.b32.xlu0 %v272, 32
      %v513 = vpop.permute.xlu0 %512
      %514 = vrot.lane.b32.xlu0 %v273, 32
      %v515 = vpop.permute.xlu0 %514
      %516 = vrot.lane.b32.xlu0 %v274, 32
      %v517 = vpop.permute.xlu0 %516
      %518 = vrot.lane.b32.xlu0 %v275, 32
      %v519 = vpop.permute.xlu0 %518
      %520 = vrot.lane.b32.xlu0 %v276, 32
      %v521 = vpop.permute.xlu0 %520
      %522 = vrot.lane.b32.xlu0 %v277, 32
      %v523 = vpop.permute.xlu0 %522
      %524 = vrot.lane.b32.xlu0 %v278, 32
      %v525 = vpop.permute.xlu0 %524
      %526 = vrot.lane.b32.xlu0 %v279, 32
      %v527 = vpop.permute.xlu0 %526
      %vm536 = vcmask 31744
      %v537 = vsel %vm536, %v197, %v289
      %v538 = vsel %vm536, %v198, %v291
      %v539 = vsel %vm536, %v199, %v293
      %v540 = vsel %vm536, %v200, %v295
      %v541 = vsel %vm536, %v201, %v297
      %v542 = vsel %vm536, %v202, %v299
      %v543 = vsel %vm536, %v203, %v301
      %v544 = vsel %vm536, %v204, %v303
      %vm545 = vcmask 64512
      %v546 = vsel %vm545, %v537, %v321
      %v547 = vsel %vm545, %v538, %v323
      %v548 = vsel %vm545, %v539, %v325
      %v549 = vsel %vm545, %v540, %v327
      %v550 = vsel %vm545, %v541, %v329
      %v551 = vsel %vm545, %v542, %v331
      %v552 = vsel %vm545, %v543, %v333
      %v553 = vsel %vm545, %v544, %v335
      %vm554 = vcmask 97280
      %v555 = vsel %vm554, %v546, %v353
      %v556 = vsel %vm554, %v547, %v355
      %v557 = vsel %vm554, %v548, %v357
      %v558 = vsel %vm554, %v549, %v359
      %v559 = vsel %vm554, %v550, %v361
      %v560 = vsel %vm554, %v551, %v363
      %v561 = vsel %vm554, %v552, %v365
      %v562 = vsel %vm554, %v553, %v367
      %vm563 = vcmask 130048
      %v564 = vsel %vm563, %v555, %v385
      %v565 = vsel %vm563, %v556, %v387
      %v566 = vsel %vm563, %v557, %v389
      %v567 = vsel %vm563, %v558, %v391
      %v568 = vsel %vm563, %v559, %v393
      %v569 = vsel %vm563, %v560, %v395
      %v570 = vsel %vm563, %v561, %v397
      %v571 = vsel %vm563, %v562, %v399
      %vm572 = vcmask 162816
      %v573 = vsel %vm572, %v564, %v417
      %v574 = vsel %vm572, %v565, %v419
      %v575 = vsel %vm572, %v566, %v421
      %v576 = vsel %vm572, %v567, %v423
      %v577 = vsel %vm572, %v568, %v425
      %v578 = vsel %vm572, %v569, %v427
      %v579 = vsel %vm572, %v570, %v429
      %v580 = vsel %vm572, %v571, %v431
      %vm581 = vcmask 195584
      %v582 = vsel %vm581, %v573, %v449
      %v583 = vsel %vm581, %v574, %v451
      %v584 = vsel %vm581, %v575, %v453
      %v585 = vsel %vm581, %v576, %v455
      %v586 = vsel %vm581, %v577, %v457
      %v587 = vsel %vm581, %v578, %v459
      %v588 = vsel %vm581, %v579, %v461
      %v589 = vsel %vm581, %v580, %v463
      %vm590 = vcmask 228352
      %v591 = vsel %vm590, %v582, %v481
      %v592 = vsel %vm590, %v583, %v483
      %v593 = vsel %vm590, %v584, %v485
      %v594 = vsel %vm590, %v585, %v487
      %v595 = vsel %vm590, %v586, %v489
      %v596 = vsel %vm590, %v587, %v491
      %v597 = vsel %vm590, %v588, %v493
      %v598 = vsel %vm590, %v589, %v495
      %vm599 = vcmask 261120
      %v600 = vsel %vm599, %v591, %v513
      %v601 = vsel %vm599, %v592, %v515
      %v602 = vsel %vm599, %v593, %v517
      %v603 = vsel %vm599, %v594, %v519
      %v604 = vsel %vm599, %v595, %v521
      %v605 = vsel %vm599, %v596, %v523
      %v606 = vsel %vm599, %v597, %v525
      %v607 = vsel %vm599, %v598, %v527
      %v608 = vld [vmem:[%s1] sm:$0xff]
      %v609 = vld [vmem:[%s1 + $0x8] sm:$0xff]
      %v610 = vld [vmem:[%s1 + $0x10] sm:$0xff]
      %v611 = vld [vmem:[%s1 + $0x18] sm:$0xff]
      %v612 = vld [vmem:[%s1 + $0x20] sm:$0xf]
      %v613 = vld [vmem:[%s2] sm:$0x1]
      %v615 = vperm.slane %v613, 0
      %vm617 = vcmask 293888
      %v619 = vsel %vm617, %v600, 0
      %v622 = vsel %vm617, %v601, 0
      %v625 = vsel %vm617, %v602, 0
      %v628 = vsel %vm617, %v603, 0
      %v631 = vsel %vm617, %v604, 0
      %v634 = vsel %vm617, %v605, 0
      %v637 = vsel %vm617, %v606, 0
      %v640 = vsel %vm617, %v607, 0
      %vm642 = vcmask 1043456
      %v644 = vsel %vm642, %v612, 0
      %646 = vmatpush.msra.mxu0 0.0
      %647 = vmatpush.msra.mxu0 0.0
      %648 = vmatpush.msra.mxu0 0.0
      %649 = vmatpush.msra.mxu0 0.0
      %650 = vmatpush.msra.mxu0 0.0
      %651 = vmatpush.msra.mxu0 0.0
      %652 = vmatpush.msra.mxu0 0.0
      %653 = vmatpush.msra.mxu0 0.0
      %654 = vmatpush.msra.mxu0 0.0
      %655 = vmatpush.msra.mxu0 0.0
      %656 = vmatpush.msra.mxu0 0.0
      %657 = vmatpush.msra.mxu0 %v644
      %658 = vmatpush.msra.mxu0 %v611
      %659 = vmatpush.msra.mxu0 %v610
      %660 = vmatpush.msra.mxu0 %v609
      %661 = vmatpush.msra.mxu0 %v608
      %662 = vmatmul.f32.gmra.mxu0 %v619
      %v663 = vpop.f32.mrf.mxu0
      %v664 = vadd.f32 %v615, %v663
      %665 = vmatmul.f32.gmra.mxu0 %v622
      %v666 = vpop.f32.mrf.mxu0
      %v667 = vadd.f32 %v615, %v666
      %668 = vmatmul.f32.gmra.mxu0 %v625
      %v669 = vpop.f32.mrf.mxu0
      %v670 = vadd.f32 %v615, %v669
      %671 = vmatmul.f32.gmra.mxu0 %v628
      %v672 = vpop.f32.mrf.mxu0
      %v673 = vadd.f32 %v615, %v672
      %674 = vmatmul.f32.gmra.mxu0 %v631
      %v675 = vpop.f32.mrf.mxu0
      %v676 = vadd.f32 %v615, %v675
      %677 = vmatmul.f32.gmra.mxu0 %v634
      %v678 = vpop.f32.mrf.mxu0
      %v679 = vadd.f32 %v615, %v678
      %680 = vmatmul.f32.gmra.mxu0 %v637
      %v681 = vpop.f32.mrf.mxu0
      %v682 = vadd.f32 %v615, %v681
      %683 = vmatmul.f32.gmra.mxu0 %v640
      %v684 = vpop.f32.mrf.mxu0
      %v685 = vadd.f32 %v615, %v684
      %686 = vdwg.mxu0
      %v687 = vmax.f32 %v664, 0.0
      %v688 = vmax.f32 %v667, 0.0
      %v689 = vmax.f32 %v670, 0.0
      %v690 = vmax.f32 %v673, 0.0
      %v691 = vmax.f32 %v676, 0.0
      %v692 = vmax.f32 %v679, 0.0
      %v693 = vmax.f32 %v682, 0.0
      %v694 = vmax.f32 %v685, 0.0
      %695 = vst.msk [vmem:[%s192] sm:$0xff] %vm545, %v687
      %696 = vst.msk [vmem:[%s192 + $0x8] sm:$0xff] %vm545, %v688
      %697 = vst.msk [vmem:[%s192 + $0x10] sm:$0xff] %vm545, %v689
      %698 = vst.msk [vmem:[%s192 + $0x18] sm:$0xff] %vm545, %v690
      %699 = vst.msk [vmem:[%s192 + $0x20] sm:$0xff] %vm545, %v691
      %700 = vst.msk [vmem:[%s192 + $0x28] sm:$0xff] %vm545, %v692
      %701 = vst.msk [vmem:[%s192 + $0x30] sm:$0xff] %vm545, %v693
      %702 = vst.msk [vmem:[%s192 + $0x38] sm:$0xff] %vm545, %v694
      %s703 = smul.u32 8, %s19
      %p704 = scmp.lt.s32.totalorder %s18, 1
      %s705 = scalar_select %p704, %s18, 1
      %p706 = scmp.lt.s32.totalorder %s703, 7
      %s707 = scalar_select %p706, %s703, 7
      %s708 = smul.addr %s705, 8
      %s709 = sadd.s32 %s707, %s708
      %s710 = smul.addr %s709, 8
      %s711 = scalar_lea.vmem %s3, %s710
      // Predicated region
      $region33: #{tpu_custom_call.1} parent=31 // pred_check
        %p712 = pneg %p114
      $region34: #{tpu_custom_call.1} parent=31 // pred_check_branch
        %714 = sbr.rel (%p712) target = $region36
      $region35: #{tpu_custom_call.1} parent=31 // pred_region
        %s715 = smul.u32 8, %s19
      $region36: #{tpu_custom_call.1} parent=31 // pred_fallthru
        _
    $region32: #{tpu_custom_call.1} parent=5 // pred_fallthru
      _
    %p716 = scmp.le.s32.totalorder 2, %s9
    // Predicated region
    $region37: #{tpu_custom_call.1} parent=5 // pred_check
      %p717 = pneg %p716
    $region38: #{tpu_custom_call.1} parent=5 // pred_check_branch
      %719 = sbr.rel (%p717) target = $region40
    $region39: #{tpu_custom_call.1} parent=5 // pred_region
      %s720 = ssub.s32 %s9, 2
      // Predicated region
      $region41: #{tpu_custom_call.1} parent=39 // pred_check
        %p721 = pneg %p120
      $region42: #{tpu_custom_call.1} parent=39 // pred_check_branch
        %723 = sbr.rel (%p721) target = $region44
      $region43: #{tpu_custom_call.1} parent=39 // pred_region
        %s724 = smul.u32 8, %s21
        %p725 = scmp.lt.s32.totalorder %s20, 1
        %s726 = scalar_select %p725, %s20, 1
        %p727 = scmp.lt.s32.totalorder %s724, 7
        %s728 = scalar_select %p727, %s724, 7
        %s729 = smul.addr %s726, 8
        %s730 = sadd.s32 %s728, %s729
        %s731 = smul.addr %s730, 8
        %s732 = scalar_lea.vmem %s3, %s731
      $region44: #{tpu_custom_call.1} parent=39 // pred_fallthru
        _
    $region40: #{tpu_custom_call.1} parent=5 // pred_fallthru
      _
  $region6: #{tpu_custom_call.1} parent=0 // loop_footer
    %s13 = sadd.s32 1, %s9
  $region7: #{tpu_custom_call.1} parent=0 // loop_footer_branch
    %8 = sbr.rel target = $region3
  $region8: #{tpu_custom_call.1} parent=0 // loop_exit
    _

</llo_original>
